<compile_context>
chip_gen: v7x
topology: tpu7x:2x2x1
jax: 0.10.0
libtpu: 0.0.40
codegen_flags: <defaults>
</compile_context>

<pallas_src>
import jax
import jax.numpy as jnp
from jax.experimental import pallas as pl
from jax.experimental.pallas import tpu as pltpu


def _round_up(n, m):
    return ((n + m - 1) // m) * m


def _num_tensorcores():
    """2 for megacore-style parts (v4 / v5p / v7x: two TCs addressable by one
    pallas_call via 'parallel' grid axes), else 1."""
    try:
        kind = jax.devices()[0].device_kind.lower()
    except Exception:
        return 1
    if "v4" in kind or "v5p" in kind or "v7" in kind or "7x" in kind:
        return 2
    return 1


# ----------------------------------------------------------------------------
# One-time (module-init) parameter prep: fold affine transforms + lane packing.
# ----------------------------------------------------------------------------
def _choose_pack(d_in, d_out):
    """Pack factor so pack*D_out is a multiple of 128 (unmasked stores), grown
    so pack*D_in is also a multiple of 128 (lane-dense x stream) while keeping
    the packed weight modest."""
    if d_out >= 128 or 128 % d_out != 0:
        return 1
    pack = 128 // d_out
    p = pack
    while (p * d_in) % 128 != 0 and p * d_out < 512:
        p *= 2
    if (p * d_in) % 128 == 0 and p * d_out <= 512:
        pack = p
    return pack


def fold_and_pack_params(a_in, b_in, w, b, a_out, b_out):
    """Fold arg/ret affine transforms into the Linear params and pack `pack`
    batch rows per output row so both K and N are full 128-lane groups.

    Returns (w_packed [pack*D_in, pack*D_out], b_packed [1, pack*D_out], pack).
    """
    d_in, d_out = w.shape
    # ((x*a_in + b_in) @ W + b) * a_out + b_out  ==  x @ W' + b'
    w_f = (a_in.reshape(d_in, 1) * w) * a_out          # [D_in, D_out]
    b_f = (b_in @ w + b) * a_out + b_out                # [1, D_out]

    pack = _choose_pack(d_in, d_out)
    if pack > 1:
        w_f = jnp.kron(jnp.eye(pack, dtype=w_f.dtype), w_f)   # block-diagonal
        b_f = jnp.tile(b_f, (1, pack))
    return w_f, b_f, pack


# ----------------------------------------------------------------------------
# Pallas kernel: fused  out = x @ W + b  on one batch tile (MXU + bias add).
# ----------------------------------------------------------------------------
def fused_linear_kernel(x_ref, w_ref, b_ref, o_ref):
    y = jnp.dot(x_ref[...], w_ref[...], preferred_element_type=jnp.float32)
    o_ref[...] = (y + b_ref[...]).astype(o_ref.dtype)


def fused_linear(x, w, b, *, use_bf16=False, out_dtype=jnp.float32,
                 max_tile=4096):
    """out[i] = x[i] @ w + b, tiled over rows of x (generation-aware tiling)."""
    rows, k = x.shape
    n = w.shape[1]
    num_tc = _num_tensorcores()

    # --- tile / grid plan -----------------------------------------------
    if rows <= max_tile and not (num_tc >= 2 and rows >= 1024):
        # Single grid step; block == full array dims, so no row padding and
        # no post-kernel slice (kills two wrapper-side HBM copies).
        tb, rows_p = rows, rows
    else:
        # Split only when each step is large enough to amortize the ~0.35us
        # per-step overhead (and to fit VMEM).
        steps = max(pl.cdiv(rows, max_tile),
                    num_tc if rows >= 1024 else 1)
        tb = _round_up(pl.cdiv(rows, steps), 8)
        rows_p = _round_up(rows, tb)
    if rows_p != rows:
        x = jnp.pad(x, ((0, rows_p - rows), (0, 0)))

    if use_bf16:
        # Halves the HBM bytes of the dominant x/W streams; MXU still
        # accumulates in f32 via preferred_element_type.
        x = x.astype(jnp.bfloat16)
        w = w.astype(jnp.bfloat16)

    in_item = jnp.dtype(x.dtype).itemsize
    out_item = jnp.dtype(out_dtype).itemsize
    grid = (rows_p // tb,)

    # Explicit VMEM budget: double-buffered x + out tiles, plus W/b buffers.
    needed = 2 * (tb * k * in_item + tb * n * out_item) \
        + 2 * (k * n * in_item + n * 4)
    vmem_limit = int(min(128 << 20, max(32 << 20, needed + (4 << 20))))

    cost = pl.CostEstimate(
        flops=2 * rows_p * k * n,
        transcendentals=0,
        bytes_accessed=in_item * (rows_p * k + k * n)
        + 4 * n + out_item * rows_p * n,
    )
    out = pl.pallas_call(
        fused_linear_kernel,
        out_shape=jax.ShapeDtypeStruct((rows_p, n), out_dtype),
        grid=grid,
        in_specs=[
            pl.BlockSpec((tb, k), lambda i: (i, 0)),   # x tile (streamed)
            pl.BlockSpec((k, n), lambda i: (0, 0)),    # folded weight (resident)
            pl.BlockSpec((1, n), lambda i: (0, 0)),    # folded bias   (resident)
        ],
        out_specs=pl.BlockSpec((tb, n), lambda i: (i, 0)),
        compiler_params=pltpu.CompilerParams(
            dimension_semantics=("parallel",),
            vmem_limit_bytes=vmem_limit),
        cost_estimate=cost,
    )(x, w, b)
    return out if rows_p == rows else out[:rows]


# ----------------------------------------------------------------------------
# TransformedModule.forward equivalent (hot path, uses pre-folded params).
# ----------------------------------------------------------------------------
def transformed_module_forward(x, w_packed, b_packed, pack, *, use_bf16=False,
                               out_dtype=jnp.float32):
    """x: [B, D_in] f32; w_packed/b_packed/pack from fold_and_pack_params.
    Returns [B, D_out], identical to
    ((x * a_in + b_in) @ W + b) * a_out + b_out."""
    b_sz, d_in = x.shape
    d_out = w_packed.shape[1] // pack

    # Row packing: view `pack` consecutive batch rows as one lane-dense row
    # (row-major reshape; metadata only when B % pack == 0).
    b_pad = _round_up(b_sz, pack)
    if b_pad != b_sz:
        x = jnp.pad(x, ((0, b_pad - b_sz), (0, 0)))
    x_packed = x.reshape(b_pad // pack, pack * d_in)

    out_packed = fused_linear(x_packed, w_packed, b_packed,
                              use_bf16=use_bf16, out_dtype=out_dtype)
    out = out_packed.reshape(b_pad, d_out)
    return out[:b_sz] if b_pad != b_sz else out


def reference_forward(x, a_in, b_in, w, b, a_out, b_out):
    xt = x * a_in + b_in
    y = xt @ w + b
    return y * a_out + b_out


if __name__ == "__main__":
    key = jax.random.PRNGKey(0)
    B, D_in, D_out = 512, 32, 64

    ks = jax.random.split(key, 7)
    x     = jax.random.normal(ks[0], (B, D_in), dtype=jnp.float32)
    a_in  = 1.0 + 0.1 * jax.random.normal(ks[1], (1, D_in), dtype=jnp.float32)
    b_in  = 0.1 * jax.random.normal(ks[2], (1, D_in), dtype=jnp.float32)
    w     = jax.random.normal(ks[3], (D_in, D_out), dtype=jnp.float32) / jnp.sqrt(D_in)
    b     = 0.1 * jax.random.normal(ks[4], (1, D_out), dtype=jnp.float32)
    a_out = 1.0 + 0.1 * jax.random.normal(ks[5], (1, D_out), dtype=jnp.float32)
    b_out = 0.1 * jax.random.normal(ks[6], (1, D_out), dtype=jnp.float32)

    # Amortized, module-init-time parameter preparation (not in the hot path).
    w_p, b_p, pack = fold_and_pack_params(a_in, b_in, w, b, a_out, b_out)
    assert pack == 4 and w_p.shape == (128, 256)   # K and N both lane-dense

    ref = reference_forward(x, a_in, b_in, w, b, a_out, b_out)

    # Exact f32 path (default).
    out = jax.block_until_ready(transformed_module_forward(x, w_p, b_p, pack))
    assert out.shape == (B, D_out)
    assert jnp.allclose(out, ref, atol=1e-4, rtol=1e-4), "mismatch vs. reference"

    # bf16-streamed path (halves HBM bytes of the x/W streams; f32 accumulate).
    out_bf16 = jax.block_until_ready(
        transformed_module_forward(x, w_p, b_p, pack, use_bf16=True))
    assert jnp.allclose(out_bf16, ref, atol=3e-2, rtol=3e-2), "bf16 path mismatch"

    # TODO(synk): attr_transforms / __getattr__ & __setattr__ interception and
    # train()-mode plumbing are Python attribute mechanics with no tensor
    # compute; not representable in a kernel.
    print("KERNEL_OK")
</pallas_src>

<mosaic_0001>
module attributes {stable_mosaic.version = 11 : i64} {
  func.func @fused_linear_kernel(%arg0: i32, %arg1: memref<128x128xf32, #tpu.memory_space<vmem>>, %arg2: memref<128x256xf32, #tpu.memory_space<vmem>>, %arg3: memref<1x256xf32, #tpu.memory_space<vmem>>, %arg4: memref<128x256xf32, #tpu.memory_space<vmem>>) attributes {dimension_semantics = [#tpu.dimension_semantics<parallel>], iteration_bounds = array<i64: 1>, scalar_prefetch = 0 : i64, scratch_operands = 0 : i64, tpu.core_type = #tpu.core_type<tc>, window_params = [{transform_indices = @transform_0, window_bounds = array<i64: 128, 128>}, {pipeline_mode = #tpu.pipeline_mode<synchronous>, transform_indices = @transform_1, window_bounds = array<i64: 128, 256>}, {pipeline_mode = #tpu.pipeline_mode<synchronous>, transform_indices = @transform_2, window_bounds = array<i64: 1, 256>}, {transform_indices = @transform_3, window_bounds = array<i64: 128, 256>}]} {
    %c0 = arith.constant 0 : index
    %c0_0 = arith.constant 0 : index
    %0 = vector.load %arg1[%c0, %c0_0] : memref<128x128xf32, #tpu.memory_space<vmem>>, vector<128x128xf32>
    %c0_1 = arith.constant 0 : index
    %c0_2 = arith.constant 0 : index
    %1 = vector.load %arg2[%c0_1, %c0_2] : memref<128x256xf32, #tpu.memory_space<vmem>>, vector<128x256xf32>
    %cst = arith.constant dense<0.000000e+00> : vector<128x256xf32>
    %2 = tpu.matmul %0, %1, %cst {dimension_numbers = #tpu.dot_dimension_numbers<[1], [0], [0], [1], [0, 0, 1, 1], [], []>} : vector<128x128xf32>, vector<128x256xf32>, vector<128x256xf32> -> vector<128x256xf32>
    %c0_3 = arith.constant 0 : index
    %c0_4 = arith.constant 0 : index
    %3 = vector.load %arg3[%c0_3, %c0_4] : memref<1x256xf32, #tpu.memory_space<vmem>>, vector<1x256xf32>
    %4 = vector.broadcast %3 : vector<1x256xf32> to vector<128x256xf32>
    %5 = arith.addf %2, %4 : vector<128x256xf32>
    %c0_5 = arith.constant 0 : index
    %c0_6 = arith.constant 0 : index
    %6 = vector.load %arg4[%c0_5, %c0_6] : memref<128x256xf32, #tpu.memory_space<vmem>>, vector<128x256xf32>
    tpu.vector_store %arg4[%c0_5, %c0_6], %5 {strides = array<i32>} : memref<128x256xf32, #tpu.memory_space<vmem>>, vector<128x256xf32>,
    return
  }
  func.func @transform_0(%arg0: i32) -> (i32, i32) {
    %c0_i32 = arith.constant 0 : i32
    %c0_i32_0 = arith.constant 0 : i32
    return %arg0, %c0_i32 : i32, i32
  }
  func.func @transform_1(%arg0: i32) -> (i32, i32) {
    %c0_i32 = arith.constant 0 : i32
    %c0_i32_0 = arith.constant 0 : i32
    %c0_i32_1 = arith.constant 0 : i32
    return %c0_i32, %c0_i32_0 : i32, i32
  }
  func.func @transform_2(%arg0: i32) -> (i32, i32) {
    %c0_i32 = arith.constant 0 : i32
    %c0_i32_0 = arith.constant 0 : i32
    %c0_i32_1 = arith.constant 0 : i32
    return %c0_i32, %c0_i32_0 : i32, i32
  }
  func.func @transform_3(%arg0: i32) -> (i32, i32) {
    %c0_i32 = arith.constant 0 : i32
    %c0_i32_0 = arith.constant 0 : i32
    return %arg0, %c0_i32 : i32, i32
  }
}

</mosaic_0001>

<llo_original>
// kernel: tpu_custom_call.1
$region0: #{tpu_custom_call.1}
  #allocation0 [shape = 'u32[]', space=smem, size = 0x4, offset = 0x4, fixed_abs, tag = 'smem constant byte address 0x4 - core index']
  #allocation1 [shape = 'u32[144,128]{1,0:T(1,128)}', space=vmem, size = 0x12000, scoped, tag = 'internal scratch']
  %s0 = inlined_call_operand.hbm [shape: f32[128,128], index: 0, kind: input, shape index: {}]
  %s1 = inlined_call_operand.hbm [shape: f32[128,256], index: 1, kind: input, shape index: {}]
  %s2 = inlined_call_operand.vmem [shape: f32[1,256], index: 2, kind: input, shape index: {}]
  %s3 = inlined_call_operand.hbm [shape: f32[128,256], index: 3, kind: output, shape index: {}]
  %s4 = sld [smem:[#allocation0]]
  $region30: #{tpu_custom_call.1} parent=0
    _
  %s6 = ssub.s32 1, %s4
  %s7 = scalar_select 0, %s6, %s4
  $region1: #{tpu_custom_call.1} parent=0
    #allocation2 [shape = 'u8[65536]{0}', space=vmem, size = 0x10000, scoped, tag = 'input window, operand 0, single buffered']
    #allocation3 [shape = 's32[1]{0}', space=sflag, size = 0x4, scoped, tag = 'scoped memory for tpu_custom_call.1']
    #allocation4 [shape = 's32[1]{0}', space=sflag, size = 0x4, scoped, tag = 'scoped memory for tpu_custom_call.1']
    #allocation5 [shape = 'u8[131072]{0}', space=vmem, size = 0x20000, scoped, tag = 'input window, operand 1, single buffered']
    #allocation6 [shape = 's32[1]{0}', space=sflag, size = 0x4, scoped, tag = 'scoped memory for tpu_custom_call.1']
    #allocation7 [shape = 'u8[131072]{0}', space=vmem, size = 0x20000, scoped, tag = 'output window, operand 0, single buffered']
    %8 = vsyncpa [#allocation3], 0
    %9 = vsyncpa [#allocation6], 0
    %10 = vsyncpa [#allocation4], 0
    // Predicated region
    $region2: #{tpu_custom_call.1} parent=1 // pred_check
      _
    $region3: #{tpu_custom_call.1} parent=1 // pred_check_branch
      %12 = sbr.rel (0) target = $region5
    $region4: #{tpu_custom_call.1} parent=1 // pred_region
      %s14 = ssub.s32 2048, 2048
      %15 = vsyncadd [#allocation3], %s14
      %s16 = sshll.u32 [#allocation2], 4
      %s17 = int_to_ptr.vmem [resolvable:$true] %s16
      %22 = dma.hbm_to_vmem [thread:$0]  %s0, 2048, %s17, [#allocation3], 128, 128, 8
    $region5: #{tpu_custom_call.1} parent=1 // pred_fallthru
      _
    // Predicated region
    $region6: #{tpu_custom_call.1} parent=1 // pred_check
      _
    $region7: #{tpu_custom_call.1} parent=1 // pred_check_branch
      %24 = sbr.rel (0) target = $region9
    $region8: #{tpu_custom_call.1} parent=1 // pred_region
      %s26 = ssub.s32 4096, 4096
      %27 = vsyncadd [#allocation6], %s26
      %s28 = sshll.u32 [#allocation5], 4
      %s29 = int_to_ptr.vmem [resolvable:$true] %s28
      %34 = dma.hbm_to_vmem [thread:$0]  %s1, 4096, %s29, [#allocation6], 256, 256, 16
    $region9: #{tpu_custom_call.1} parent=1 // pred_fallthru
      _
    // Predicated region
    $region10: #{tpu_custom_call.1} parent=1 // pred_check
      _
    $region11: #{tpu_custom_call.1} parent=1 // pred_check_branch
      %36 = sbr.rel (0) target = $region13
    $region12: #{tpu_custom_call.1} parent=1 // pred_region
      _
    $region13: #{tpu_custom_call.1} parent=1 // pred_fallthru
      _
    // Predicated region
    $region14: #{tpu_custom_call.1} parent=1 // pred_check
      _
    $region15: #{tpu_custom_call.1} parent=1 // pred_check_branch
      %38 = sbr.rel (0) target = $region17
    $region16: #{tpu_custom_call.1} parent=1 // pred_region
      %39 = dma.done [#allocation3], 2048
    $region17: #{tpu_custom_call.1} parent=1 // pred_fallthru
      _
    // Predicated region
    $region18: #{tpu_custom_call.1} parent=1 // pred_check
      _
    $region19: #{tpu_custom_call.1} parent=1 // pred_check_branch
      %41 = sbr.rel (0) target = $region21
    $region20: #{tpu_custom_call.1} parent=1 // pred_region
      %42 = dma.done [#allocation6], 4096
    $region21: #{tpu_custom_call.1} parent=1 // pred_fallthru
      _
    %v43 = vld [vmem:[#allocation2] sm:$0xff]
    %v44 = vld [vmem:[#allocation2 + $0x8] sm:$0xff]
    %v45 = vld [vmem:[#allocation2 + $0x10] sm:$0xff]
    %v46 = vld [vmem:[#allocation2 + $0x18] sm:$0xff]
    %v47 = vld [vmem:[#allocation2 + $0x20] sm:$0xff]
    %v48 = vld [vmem:[#allocation2 + $0x28] sm:$0xff]
    %v49 = vld [vmem:[#allocation2 + $0x30] sm:$0xff]
    %v50 = vld [vmem:[#allocation2 + $0x38] sm:$0xff]
    %v51 = vld [vmem:[#allocation2 + $0x40] sm:$0xff]
    %v52 = vld [vmem:[#allocation2 + $0x48] sm:$0xff]
    %v53 = vld [vmem:[#allocation2 + $0x50] sm:$0xff]
    %v54 = vld [vmem:[#allocation2 + $0x58] sm:$0xff]
    %v55 = vld [vmem:[#allocation2 + $0x60] sm:$0xff]
    %v56 = vld [vmem:[#allocation2 + $0x68] sm:$0xff]
    %v57 = vld [vmem:[#allocation2 + $0x70] sm:$0xff]
    %v58 = vld [vmem:[#allocation2 + $0x78] sm:$0xff]
    %v59 = vld [vmem:[#allocation5] sm:$0xff]
    %v60 = vld [vmem:[#allocation5 + $0x8] sm:$0xff]
    %v61 = vld [vmem:[#allocation5 + $0x10] sm:$0xff]
    %v62 = vld [vmem:[#allocation5 + $0x18] sm:$0xff]
    %v63 = vld [vmem:[#allocation5 + $0x20] sm:$0xff]
    %v64 = vld [vmem:[#allocation5 + $0x28] sm:$0xff]
    %v65 = vld [vmem:[#allocation5 + $0x30] sm:$0xff]
    %v66 = vld [vmem:[#allocation5 + $0x38] sm:$0xff]
    %v67 = vld [vmem:[#allocation5 + $0x40] sm:$0xff]
    %v68 = vld [vmem:[#allocation5 + $0x48] sm:$0xff]
    %v69 = vld [vmem:[#allocation5 + $0x50] sm:$0xff]
    %v70 = vld [vmem:[#allocation5 + $0x58] sm:$0xff]
    %v71 = vld [vmem:[#allocation5 + $0x60] sm:$0xff]
    %v72 = vld [vmem:[#allocation5 + $0x68] sm:$0xff]
    %v73 = vld [vmem:[#allocation5 + $0x70] sm:$0xff]
    %v74 = vld [vmem:[#allocation5 + $0x78] sm:$0xff]
    %v75 = vld [vmem:[#allocation5 + $0x80] sm:$0xff]
    %v76 = vld [vmem:[#allocation5 + $0x88] sm:$0xff]
    %v77 = vld [vmem:[#allocation5 + $0x90] sm:$0xff]
    %v78 = vld [vmem:[#allocation5 + $0x98] sm:$0xff]
    %v79 = vld [vmem:[#allocation5 + $0xa0] sm:$0xff]
    %v80 = vld [vmem:[#allocation5 + $0xa8] sm:$0xff]
    %v81 = vld [vmem:[#allocation5 + $0xb0] sm:$0xff]
    %v82 = vld [vmem:[#allocation5 + $0xb8] sm:$0xff]
    %v83 = vld [vmem:[#allocation5 + $0xc0] sm:$0xff]
    %v84 = vld [vmem:[#allocation5 + $0xc8] sm:$0xff]
    %v85 = vld [vmem:[#allocation5 + $0xd0] sm:$0xff]
    %v86 = vld [vmem:[#allocation5 + $0xd8] sm:$0xff]
    %v87 = vld [vmem:[#allocation5 + $0xe0] sm:$0xff]
    %v88 = vld [vmem:[#allocation5 + $0xe8] sm:$0xff]
    %v89 = vld [vmem:[#allocation5 + $0xf0] sm:$0xff]
    %v90 = vld [vmem:[#allocation5 + $0xf8] sm:$0xff]
    %v91 = vld [vmem:[%s2] sm:$0x3]
    %v93 = vlaneseq
    %v94 = vshrl.u32 %v93, 7
    %v95 = vsub.s32 0, %v94
    %v96 = vrot.slane %v91, %v95
    %v97 = vlaneseq
    %v98 = vshrl.u32 %v97, 7
    %v99 = vsub.s32 1, %v98
    %v100 = vrot.slane %v91, %v99
    %103 = vmatprep.subr.mxu0 %v60
    %104 = vmatpush1.msra.mxu0 %v59
    %105 = vmatprep.subr.mxu0 %v62
    %106 = vmatpush1.msra.mxu0 %v61
    %107 = vmatprep.subr.mxu0 %v64
    %108 = vmatpush1.msra.mxu0 %v63
    %109 = vmatprep.subr.mxu0 %v66
    %110 = vmatpush1.msra.mxu0 %v65
    %111 = vmatprep.subr.mxu0 %v68
    %112 = vmatpush1.msra.mxu0 %v67
    %113 = vmatprep.subr.mxu0 %v70
    %114 = vmatpush1.msra.mxu0 %v69
    %115 = vmatprep.subr.mxu0 %v72
    %116 = vmatpush1.msra.mxu0 %v71
    %117 = vmatprep.subr.mxu0 %v74
    %118 = vmatpush1.msra.mxu0 %v73
    %119 = vmatprep.subr.mxu0 %v76
    %120 = vmatpush1.msra.mxu0 %v75
    %121 = vmatprep.subr.mxu0 %v78
    %122 = vmatpush1.msra.mxu0 %v77
    %123 = vmatprep.subr.mxu0 %v80
    %124 = vmatpush1.msra.mxu0 %v79
    %125 = vmatprep.subr.mxu0 %v82
    %126 = vmatpush1.msra.mxu0 %v81
    %127 = vmatprep.subr.mxu0 %v84
    %128 = vmatpush1.msra.mxu0 %v83
    %129 = vmatprep.subr.mxu0 %v86
    %130 = vmatpush1.msra.mxu0 %v85
    %131 = vmatprep.subr.mxu0 %v88
    %132 = vmatpush1.msra.mxu0 %v87
    %133 = vmatprep.subr.mxu0 %v90
    %134 = vmatpush1.msra.mxu0 %v89
    %135 = vmatprep.subr.mxu0 0.0
    %136 = vmatpush1.msra.mxu0 0.0
    %137 = vmatprep.subr.mxu0 0.0
    %138 = vmatpush1.msra.mxu0 0.0
    %139 = vmatprep.subr.mxu0 0.0
    %140 = vmatpush1.msra.mxu0 0.0
    %141 = vmatprep.subr.mxu0 0.0
    %142 = vmatpush1.msra.mxu0 0.0
    %143 = vmatprep.subr.mxu0 0.0
    %144 = vmatpush1.msra.mxu0 0.0
    %145 = vmatprep.subr.mxu0 0.0
    %146 = vmatpush1.msra.mxu0 0.0
    %147 = vmatprep.subr.mxu0 0.0
    %148 = vmatpush1.msra.mxu0 0.0
    %149 = vmatprep.subr.mxu0 0.0
    %150 = vmatpush1.msra.mxu0 0.0
    %151 = vmatprep.subr.mxu0 0.0
    %152 = vmatpush1.msra.mxu0 0.0
    %153 = vmatprep.subr.mxu0 0.0
    %154 = vmatpush1.msra.mxu0 0.0
    %155 = vmatprep.subr.mxu0 0.0
    %156 = vmatpush1.msra.mxu0 0.0
    %157 = vmatprep.subr.mxu0 0.0
    %158 = vmatpush1.msra.mxu0 0.0
    %159 = vmatprep.subr.mxu0 0.0
    %160 = vmatpush1.msra.mxu0 0.0
    %161 = vmatprep.subr.mxu0 0.0
    %162 = vmatpush1.msra.mxu0 0.0
    %163 = vmatprep.subr.mxu0 0.0
    %164 = vmatpush1.msra.mxu0 0.0
    %165 = vmatprep.subr.mxu0 0.0
    %166 = vmatpush1.msra.mxu0 0.0
    %167 = vmatprep.mubr.f32.mxu0 0.0
    %168 = vmatmul.mubr.f32.gmra.mrb[0].mxu0 %v43
    %v169 = vpop.f32.mrb[0].mxu0
    %v170 = vadd.f32 %v96, %v169
    %v171 = vpop.f32.mrb[0].mxu0
    %v172 = vadd.f32 %v100, %v171
    %173 = vmatprep.mubr.f32.mxu0 0.0
    %174 = vmatmul.mubr.f32.gmra.mrb[0].mxu0 %v44
    %v175 = vpop.f32.mrb[0].mxu0
    %v176 = vadd.f32 %v96, %v175
    %v177 = vpop.f32.mrb[0].mxu0
    %v178 = vadd.f32 %v100, %v177
    %179 = vmatprep.mubr.f32.mxu0 0.0
    %180 = vmatmul.mubr.f32.gmra.mrb[0].mxu0 %v45
    %v181 = vpop.f32.mrb[0].mxu0
    %v182 = vadd.f32 %v96, %v181
    %v183 = vpop.f32.mrb[0].mxu0
    %v184 = vadd.f32 %v100, %v183
    %185 = vmatprep.mubr.f32.mxu0 0.0
    %186 = vmatmul.mubr.f32.gmra.mrb[0].mxu0 %v46
    %v187 = vpop.f32.mrb[0].mxu0
    %v188 = vadd.f32 %v96, %v187
    %v189 = vpop.f32.mrb[0].mxu0
    %v190 = vadd.f32 %v100, %v189
    %191 = vmatprep.mubr.f32.mxu0 0.0
    %192 = vmatmul.mubr.f32.gmra.mrb[0].mxu0 %v47
    %v193 = vpop.f32.mrb[0].mxu0
    %v194 = vadd.f32 %v96, %v193
    %v195 = vpop.f32.mrb[0].mxu0
    %v196 = vadd.f32 %v100, %v195
    %197 = vmatprep.mubr.f32.mxu0 0.0
    %198 = vmatmul.mubr.f32.gmra.mrb[0].mxu0 %v48
    %v199 = vpop.f32.mrb[0].mxu0
    %v200 = vadd.f32 %v96, %v199
    %v201 = vpop.f32.mrb[0].mxu0
    %v202 = vadd.f32 %v100, %v201
    %203 = vmatprep.mubr.f32.mxu0 0.0
    %204 = vmatmul.mubr.f32.gmra.mrb[0].mxu0 %v49
    %v205 = vpop.f32.mrb[0].mxu0
    %v206 = vadd.f32 %v96, %v205
    %v207 = vpop.f32.mrb[0].mxu0
    %v208 = vadd.f32 %v100, %v207
    %209 = vmatprep.mubr.f32.mxu0 0.0
    %210 = vmatmul.mubr.f32.gmra.mrb[0].mxu0 %v50
    %v211 = vpop.f32.mrb[0].mxu0
    %v212 = vadd.f32 %v96, %v211
    %v213 = vpop.f32.mrb[0].mxu0
    %v214 = vadd.f32 %v100, %v213
    %215 = vmatprep.mubr.f32.mxu0 0.0
    %216 = vmatmul.mubr.f32.gmra.mrb[0].mxu0 %v51
    %v217 = vpop.f32.mrb[0].mxu0
    %v218 = vadd.f32 %v96, %v217
    %v219 = vpop.f32.mrb[0].mxu0
    %v220 = vadd.f32 %v100, %v219
    %221 = vmatprep.mubr.f32.mxu0 0.0
    %222 = vmatmul.mubr.f32.gmra.mrb[0].mxu0 %v52
    %v223 = vpop.f32.mrb[0].mxu0
    %v224 = vadd.f32 %v96, %v223
    %v225 = vpop.f32.mrb[0].mxu0
    %v226 = vadd.f32 %v100, %v225
    %227 = vmatprep.mubr.f32.mxu0 0.0
    %228 = vmatmul.mubr.f32.gmra.mrb[0].mxu0 %v53
    %v229 = vpop.f32.mrb[0].mxu0
    %v230 = vadd.f32 %v96, %v229
    %v231 = vpop.f32.mrb[0].mxu0
    %v232 = vadd.f32 %v100, %v231
    %233 = vmatprep.mubr.f32.mxu0 0.0
    %234 = vmatmul.mubr.f32.gmra.mrb[0].mxu0 %v54
    %v235 = vpop.f32.mrb[0].mxu0
    %v236 = vadd.f32 %v96, %v235
    %v237 = vpop.f32.mrb[0].mxu0
    %v238 = vadd.f32 %v100, %v237
    %239 = vmatprep.mubr.f32.mxu0 0.0
    %240 = vmatmul.mubr.f32.gmra.mrb[0].mxu0 %v55
    %v241 = vpop.f32.mrb[0].mxu0
    %v242 = vadd.f32 %v96, %v241
    %v243 = vpop.f32.mrb[0].mxu0
    %v244 = vadd.f32 %v100, %v243
    %245 = vmatprep.mubr.f32.mxu0 0.0
    %246 = vmatmul.mubr.f32.gmra.mrb[0].mxu0 %v56
    %v247 = vpop.f32.mrb[0].mxu0
    %v248 = vadd.f32 %v96, %v247
    %v249 = vpop.f32.mrb[0].mxu0
    %v250 = vadd.f32 %v100, %v249
    %251 = vmatprep.mubr.f32.mxu0 0.0
    %252 = vmatmul.mubr.f32.gmra.mrb[0].mxu0 %v57
    %v253 = vpop.f32.mrb[0].mxu0
    %v254 = vadd.f32 %v96, %v253
    %v255 = vpop.f32.mrb[0].mxu0
    %v256 = vadd.f32 %v100, %v255
    %257 = vmatprep.mubr.f32.mxu0 0.0
    %258 = vmatmul.mubr.f32.gmra.mrb[0].mxu0 %v58
    %v259 = vpop.f32.mrb[0].mxu0
    %v260 = vadd.f32 %v96, %v259
    %v261 = vpop.f32.mrb[0].mxu0
    %v262 = vadd.f32 %v100, %v261
    %263 = vdwg.mxu0
    %264 = vst [vmem:[#allocation7] sm:$0xff] %v170
    %265 = vst [vmem:[#allocation7 + $0x8] sm:$0xff] %v172
    %266 = vst [vmem:[#allocation7 + $0x10] sm:$0xff] %v176
    %267 = vst [vmem:[#allocation7 + $0x18] sm:$0xff] %v178
    %268 = vst [vmem:[#allocation7 + $0x20] sm:$0xff] %v182
    %269 = vst [vmem:[#allocation7 + $0x28] sm:$0xff] %v184
    %270 = vst [vmem:[#allocation7 + $0x30] sm:$0xff] %v188
    %271 = vst [vmem:[#allocation7 + $0x38] sm:$0xff] %v190
    %272 = vst [vmem:[#allocation7 + $0x40] sm:$0xff] %v194
    %273 = vst [vmem:[#allocation7 + $0x48] sm:$0xff] %v196
    %274 = vst [vmem:[#allocation7 + $0x50] sm:$0xff] %v200
    %275 = vst [vmem:[#allocation7 + $0x58] sm:$0xff] %v202
    %276 = vst [vmem:[#allocation7 + $0x60] sm:$0xff] %v206
    %277 = vst [vmem:[#allocation7 + $0x68] sm:$0xff] %v208
    %278 = vst [vmem:[#allocation7 + $0x70] sm:$0xff] %v212
    %279 = vst [vmem:[#allocation7 + $0x78] sm:$0xff] %v214
    %280 = vst [vmem:[#allocation7 + $0x80] sm:$0xff] %v218
    %281 = vst [vmem:[#allocation7 + $0x88] sm:$0xff] %v220
    %282 = vst [vmem:[#allocation7 + $0x90] sm:$0xff] %v224
    %283 = vst [vmem:[#allocation7 + $0x98] sm:$0xff] %v226
    %284 = vst [vmem:[#allocation7 + $0xa0] sm:$0xff] %v230
    %285 = vst [vmem:[#allocation7 + $0xa8] sm:$0xff] %v232
    %286 = vst [vmem:[#allocation7 + $0xb0] sm:$0xff] %v236
    %287 = vst [vmem:[#allocation7 + $0xb8] sm:$0xff] %v238
    %288 = vst [vmem:[#allocation7 + $0xc0] sm:$0xff] %v242
    %289 = vst [vmem:[#allocation7 + $0xc8] sm:$0xff] %v244
    %290 = vst [vmem:[#allocation7 + $0xd0] sm:$0xff] %v248
    %291 = vst [vmem:[#allocation7 + $0xd8] sm:$0xff] %v250
    %292 = vst [vmem:[#allocation7 + $0xe0] sm:$0xff] %v254
    %293 = vst [vmem:[#allocation7 + $0xe8] sm:$0xff] %v256
    %294 = vst [vmem:[#allocation7 + $0xf0] sm:$0xff] %v260
    %295 = vst [vmem:[#allocation7 + $0xf8] sm:$0xff] %v262
    // Predicated region
    $region22: #{tpu_custom_call.1} parent=1 // pred_check
      _
    $region23: #{tpu_custom_call.1} parent=1 // pred_check_branch
      %297 = sbr.rel (0) target = $region25
    $region24: #{tpu_custom_call.1} parent=1 // pred_region
      %s299 = ssub.s32 4096, 4096
      %300 = vsyncadd [#allocation4], %s299
      %s301 = sshll.u32 [#allocation7], 4
      %s302 = int_to_ptr.vmem [resolvable:$true] %s301
      %307 = dma.vmem_to_hbm [thread:$0]  %s302, 4096, %s3, [#allocation4], 256, 256, 16
    $region25: #{tpu_custom_call.1} parent=1 // pred_fallthru
      _
    // Predicated region
    $region26: #{tpu_custom_call.1} parent=1 // pred_check
      _
    $region27: #{tpu_custom_call.1} parent=1 // pred_check_branch
      %309 = sbr.rel (0) target = $region29
    $region28: #{tpu_custom_call.1} parent=1 // pred_region
      %310 = dma.done [#allocation4], 4096
    $region29: #{tpu_custom_call.1} parent=1 // pred_fallthru
      _
    %311 = vsyncpa [#allocation3], 1
    %312 = vsyncpa [#allocation6], 1
    %313 = vsyncpa [#allocation4], 1

</llo_original>
